<compile_context>
chip_gen: v6e
topology: v6e:2x2x1
jax: 0.10.0
libtpu: 0.0.40
codegen_flags: <defaults>
</compile_context>

<pallas_src>
import math

import jax
import jax.numpy as jnp
from jax import lax
from jax.experimental import pallas as pl
from jax.experimental.pallas import tpu as pltpu


# -----------------------------------------------------------------------------
# Kernel A: HW-resolution phase (per image) -> x_center (OUT, CTR), f_cat_avg.
# -----------------------------------------------------------------------------
def hgd_kernel_hw(
    g2d_ref,      # (1, C, HW)  bf16  guide2_down
    g1d_ref,      # (1, C, HW)  bf16  guide1_down
    x_ref,        # (1, C, HW)  bf16  x
    wA_ref,       # (OUT+CTR, 3C) bf16  rows [conv_cat ; conv_center[0]],
                  #                     cols [guide2_down | guide1_down | x]
    bA_ref,       # (OUT+CTR, 1)  f32
    wc2_ref,      # (CTR, CTR)    bf16  conv_center[1]
    bc2_ref,      # (CTR, 1)      f32
    xcenter_ref,  # (1, OUT, CTR) f32
    favg_ref,     # (1, OUT, 1)   f32
):
    f32 = jnp.float32
    bf16 = jnp.bfloat16

    c = g2d_ref.shape[1]
    out = xcenter_ref.shape[1]

    wA = wA_ref[...]
    # conv_cat and conv_center[0] share the input: one row-stacked pass, split
    # into per-source column blocks (no x_cat concat materialized in HBM).
    f_all = (
        jnp.dot(wA[:, :c], g2d_ref[0], preferred_element_type=f32)
        + jnp.dot(wA[:, c:2 * c], g1d_ref[0], preferred_element_type=f32)
        + jnp.dot(wA[:, 2 * c:], x_ref[0], preferred_element_type=f32)
        + bA_ref[...]
    )
    f_all = jnp.maximum(f_all, 0.0)          # ReLU of both stacked stages
    f_cat = f_all[:out]                      # (OUT, HW)  f32
    f_c = f_all[out:]                        # (CTR, HW)  f32  (stays f32)

    # conv_center[1] (+BN, no ReLU), then exact softmax over spatial positions.
    f_center = jnp.dot(wc2_ref[...], f_c.astype(bf16),
                       preferred_element_type=f32) + bc2_ref[...]
    m = jnp.max(f_center, axis=-1, keepdims=True)
    e = jnp.exp(f_center - m)
    p = e / jnp.sum(e, axis=-1, keepdims=True)           # (CTR, HW) f32

    # x_center = f_cat @ softmax^T: contract the HW (lane) axis of both
    # operands (flash-attention QK^T pattern -> no large transpose).
    xcenter_ref[0] = lax.dot_general(
        f_cat.astype(bf16), p.astype(bf16),
        dimension_numbers=(((1,), (1,)), ((), ())),
        preferred_element_type=f32)                       # (OUT, CTR)

    # adaptive avg pool over HW (== value_avg before its spatial broadcast)
    favg_ref[0] = jnp.mean(f_cat, axis=-1, keepdims=True)  # (OUT, 1)


# -----------------------------------------------------------------------------
# Kernel B: HW2-resolution phase, tiled along the flattened spatial axis.
# -----------------------------------------------------------------------------
def hgd_kernel_hw2(
    g2_ref,       # (1, C, T)   bf16  guide2 tile
    xu1_ref,      # (1, C, T)   bf16  x_up1 tile
    xu0_ref,      # (1, C, T)   bf16  x_up0 tile
    xcenter_ref,  # (1, OUT, CTR) f32
    favg_ref,     # (1, OUT, 1)   f32
    w0_ref,       # (2*OUT, 3C) bf16  rows [affinity0_lane ; affinity0_drivable]
                  #                   cols [guide2 | x_up1 | x_up0]
                  #                   (drivable's guide2 block is zero)
    b0_ref,       # (2*OUT, 1)  f32
    wa11_ref, ba11_ref,           # conv_affinity1[0]  (CTR, OUT), (CTR, 1)
    wa12_ref, ba12_ref,           # conv_affinity1[1]  (CTR, CTR), (CTR, 1)
    wupa_ref, wupb_ref, bup_ref,  # conv_up split      (OUT, OUT) x2, (OUT, 1)
    out_lane_ref,  # (1, OUT, T)  f32
    out_drv_ref,   # (1, OUT, T)  f32
):
    f32 = jnp.float32
    bf16 = jnp.bfloat16

    c = g2_ref.shape[1]
    out = out_lane_ref.shape[1]
    ctr = wa12_ref.shape[0]

    w0 = w0_ref[...]
    # Both conv_affinity0 branches in one row-stacked pass over the three
    # sources (no guide_cat concats; x_up0/x_up1 are read once, not twice).
    pre = (
        jnp.dot(w0[:, :c], g2_ref[0], preferred_element_type=f32)
        + jnp.dot(w0[:, c:2 * c], xu1_ref[0], preferred_element_type=f32)
        + jnp.dot(w0[:, 2 * c:], xu0_ref[0], preferred_element_type=f32)
        + b0_ref[...]
    )
    pre = jnp.maximum(pre, 0.0)
    gc_lane = pre[:out]        # guide_cat_conv_lane      (OUT, T) f32
    gc_drv = pre[out:]         # guide_cat_conv_drivable  (OUT, T) f32

    favg = favg_ref[0]                       # (OUT, 1) f32
    xc = xcenter_ref[0].astype(bf16)         # (OUT, CTR)
    norm_aff = ctr ** (-0.5)

    def branch(gc, o_ref):
        # conv_affinity1: two 1x1 conv+BN+ReLU stages (shared weights).
        g = (gc + favg).astype(bf16)
        t = jnp.maximum(
            jnp.dot(wa11_ref[...], g, preferred_element_type=f32) + ba11_ref[...],
            0.0)
        aff = jnp.maximum(
            jnp.dot(wa12_ref[...], t.astype(bf16),
                    preferred_element_type=f32) + ba12_ref[...],
            0.0)                                              # (CTR, T) f32
        # x_up = norm_aff * x_center @ f_affinity
        x_up = norm_aff * jnp.dot(xc, aff.astype(bf16),
                                  preferred_element_type=f32)  # (OUT, T) f32
        # conv_up(cat([x_up, guide_cat_conv], C)) with the weight split in halves
        y = jnp.maximum(
            jnp.dot(wupa_ref[...], x_up.astype(bf16), preferred_element_type=f32)
            + jnp.dot(wupb_ref[...], gc.astype(bf16), preferred_element_type=f32)
            + bup_ref[...],
            0.0)
        o_ref[0] = y.astype(o_ref.dtype)      # direct lane-dense store

    branch(gc_lane, out_lane_ref)
    branch(gc_drv, out_drv_ref)


# -----------------------------------------------------------------------------
# Plain-JAX glue: align_corners=True bilinear resize as separable matrices
# -----------------------------------------------------------------------------
def _interp_matrix(out_size, in_size):
    if out_size > 1:
        src = jnp.arange(out_size, dtype=jnp.float32) * (in_size - 1) / (out_size - 1)
    else:
        src = jnp.zeros((out_size,), dtype=jnp.float32)
    i0 = jnp.clip(jnp.floor(src).astype(jnp.int32), 0, in_size - 1)
    i1 = jnp.clip(i0 + 1, 0, in_size - 1)
    frac = src - i0.astype(jnp.float32)
    rows = jnp.arange(out_size)
    M = jnp.zeros((out_size, in_size), dtype=jnp.float32)
    M = M.at[rows, i0].add(1.0 - frac)
    M = M.at[rows, i1].add(frac)
    return M


def bilinear_align_corners(x_nchw, out_h, out_w):
    n, c, h, w = x_nchw.shape
    Mh = _interp_matrix(out_h, h)
    Mw = _interp_matrix(out_w, w)
    return jnp.einsum("oh,pw,nchw->ncop", Mh, Mw, x_nchw)


# -----------------------------------------------------------------------------
# Parameter construction (deterministic, synthetic).  Conv(1x1, no bias) + BN
# folded into a single (Cout, Cin) matrix + (Cout, 1) bias (channels-first).
# -----------------------------------------------------------------------------
def make_conv_bn(key, cin, cout, eps=1e-5):
    k1, k2, k3, k4, k5 = jax.random.split(key, 5)
    W = jax.random.normal(k1, (cout, cin), jnp.float32) / math.sqrt(cin)
    gamma = 1.0 + 0.1 * jax.random.normal(k2, (cout,), jnp.float32)
    beta = 0.1 * jax.random.normal(k3, (cout,), jnp.float32)
    mean = 0.1 * jax.random.normal(k4, (cout,), jnp.float32)
    var = jnp.abs(jax.random.normal(k5, (cout,), jnp.float32)) + 0.5
    scale = gamma / jnp.sqrt(var + eps)
    shift = beta - mean * scale
    Wf = (W * scale[:, None]).astype(jnp.float32)   # (cout, cin)
    b = shift[:, None].astype(jnp.float32)          # (cout, 1)
    return Wf, b


def make_params(key, c, ctr, out):
    ks = jax.random.split(key, 8)
    p = {}
    p["w_cat"], p["b_cat"] = make_conv_bn(ks[0], 3 * c, out)
    p["w_c1"], p["b_c1"] = make_conv_bn(ks[1], 3 * c, ctr)
    p["w_c2"], p["b_c2"] = make_conv_bn(ks[2], ctr, ctr)
    p["w_a0l"], p["b_a0l"] = make_conv_bn(ks[3], 3 * c, out)   # cols [g2|u1|u0]
    p["w_a0d"], p["b_a0d"] = make_conv_bn(ks[4], 2 * c, out)   # cols [u1|u0]
    p["w_a11"], p["b_a11"] = make_conv_bn(ks[5], out, ctr)
    p["w_a12"], p["b_a12"] = make_conv_bn(ks[6], ctr, ctr)
    w_up, p["b_up"] = make_conv_bn(ks[7], 2 * out, out)
    p["w_up_a"] = w_up[:, :out]     # multiplies x_up
    p["w_up_b"] = w_up[:, out:]     # multiplies guide_cat_conv
    return p


def _pack_weights(p, c, ctr, out):
    """Pack per-stage weights into a few consolidated kernel inputs."""
    bf16 = jnp.bfloat16
    f32 = jnp.float32
    # Kernel A: rows [conv_cat ; conv_center[0]], cols [g2_down | g1_down | x]
    wA = jnp.concatenate([p["w_cat"], p["w_c1"]], axis=0).astype(bf16)
    bA = jnp.concatenate([p["b_cat"], p["b_c1"]], axis=0).astype(f32)
    wkA = (wA, bA, p["w_c2"].astype(bf16), p["b_c2"].astype(f32))
    # Kernel B affinity0: rows [lane ; drivable], cols [g2 | x_up1 | x_up0];
    # drivable has no guide2 input -> zero block.
    w_d_pad = jnp.concatenate([jnp.zeros((out, c), f32), p["w_a0d"]], axis=1)
    w0 = jnp.concatenate([p["w_a0l"], w_d_pad], axis=0).astype(bf16)
    b0 = jnp.concatenate([p["b_a0l"], p["b_a0d"]], axis=0).astype(f32)
    wkB = (w0, b0,
           p["w_a11"].astype(bf16), p["b_a11"].astype(f32),
           p["w_a12"].astype(bf16), p["b_a12"].astype(f32),
           p["w_up_a"].astype(bf16), p["w_up_b"].astype(bf16),
           p["b_up"].astype(f32))
    return wkA, wkB


# -----------------------------------------------------------------------------
# Wrapper
# -----------------------------------------------------------------------------
def multi_hgd_forward(x, guide1, guide2, params, center_channels, out_channels):
    n, c, h, w = x.shape
    _, _, h2, w2 = guide2.shape
    hw, hw2 = h * w, h2 * w2
    ctr, out = center_channels, out_channels
    bf16 = jnp.bfloat16

    # bilinear resizes (align_corners=True), NCHW.
    # TODO(synk): fuse the x_up0/x_up1 upsamples into kernel B to avoid their
    # HW2-sized HBM write+read round trip (read low-res x/guide1 + interp
    # matrices in-kernel instead).
    x_up0 = bilinear_align_corners(x, h2, w2)
    x_up1 = bilinear_align_corners(guide1, h2, w2)
    guide1_down = bilinear_align_corners(guide1, h, w)
    guide2_down = bilinear_align_corners(guide2, h, w)

    # channels-first flattened activations, bf16 (MXU inputs) — NO concats.
    def flat(a, hw_):
        return a.reshape(n, a.shape[1], hw_).astype(bf16)

    g2d = flat(guide2_down, hw)
    g1d = flat(guide1_down, hw)
    x_f = flat(x, hw)
    g2 = flat(guide2, hw2)
    xu1 = flat(x_up1, hw2)
    xu0 = flat(x_up0, hw2)

    wkA, wkB = _pack_weights(params, c, ctr, out)

    # ---------------- kernel A: HW-resolution phase --------------------------
    def full_spec_a(arr):
        nd = arr.ndim
        return pl.BlockSpec(arr.shape, lambda i, _nd=nd: (0,) * _nd)

    act_spec_hw = pl.BlockSpec((1, c, hw), lambda i: (i, 0, 0))
    x_center, f_cat_avg = pl.pallas_call(
        hgd_kernel_hw,
        out_shape=(jax.ShapeDtypeStruct((n, out, ctr), jnp.float32),
                   jax.ShapeDtypeStruct((n, out, 1), jnp.float32)),
        grid_spec=pltpu.PrefetchScalarGridSpec(
            num_scalar_prefetch=0,
            grid=(n,),
            in_specs=[act_spec_hw, act_spec_hw, act_spec_hw]
                     + [full_spec_a(wv) for wv in wkA],
            out_specs=[pl.BlockSpec((1, out, ctr), lambda i: (i, 0, 0)),
                       pl.BlockSpec((1, out, 1), lambda i: (i, 0, 0))],
        ),
        compiler_params=pltpu.CompilerParams(
            dimension_semantics=("parallel",)),
    )(g2d, g1d, x_f, *wkA)

    # ---------------- kernel B: HW2-resolution phase, tiled along HW2 --------
    # Lane-dense tile along the flattened spatial axis.  At production sizes
    # pick the tile per generation (v7x 64 MiB VMEM vs v6e/v5e 128 MiB), raise
    # vmem_limit_bytes accordingly, and sweep pipeline_mode=pl.Buffered(2|3).
    t_hw2 = 128 if hw2 % 128 == 0 else hw2
    n_t = hw2 // t_hw2

    def full_spec_b(arr):
        nd = arr.ndim
        return pl.BlockSpec(arr.shape, lambda i, j, _nd=nd: (0,) * _nd)

    act_spec_hw2 = pl.BlockSpec((1, c, t_hw2), lambda i, j: (i, 0, j))
    out_spec_hw2 = pl.BlockSpec((1, out, t_hw2), lambda i, j: (i, 0, j))

    def per_img_spec(d):
        return pl.BlockSpec((1, out, d), lambda i, j: (i, 0, 0))

    # advisory cost estimate (helps XLA schedule the surrounding resizes)
    flops = 2 * n * hw2 * (2 * out * 3 * c
                           + 2 * (ctr * out + ctr * ctr + out * ctr
                                  + 2 * out * out))
    bytes_accessed = (3 * n * c * hw2 * 2          # bf16 activations in
                      + 2 * n * out * hw2 * 4)     # f32 outputs
    out_lane, out_drv = pl.pallas_call(
        hgd_kernel_hw2,
        out_shape=(jax.ShapeDtypeStruct((n, out, hw2), jnp.float32),
                   jax.ShapeDtypeStruct((n, out, hw2), jnp.float32)),
        grid_spec=pltpu.PrefetchScalarGridSpec(
            num_scalar_prefetch=0,
            grid=(n, n_t),
            in_specs=[act_spec_hw2, act_spec_hw2, act_spec_hw2,
                      per_img_spec(ctr), per_img_spec(1)]
                     + [full_spec_b(wv) for wv in wkB],
            out_specs=[out_spec_hw2, out_spec_hw2],
        ),
        compiler_params=pltpu.CompilerParams(
            dimension_semantics=("parallel", "parallel")),
        cost_estimate=pl.CostEstimate(flops=flops, transcendentals=0,
                                      bytes_accessed=bytes_accessed),
    )(g2, xu1, xu0, x_center, f_cat_avg, *wkB)

    # outputs are channels-first and f32 already -> plain reshape to NCHW
    return (out_lane.reshape(n, out, h2, w2),
            out_drv.reshape(n, out, h2, w2))


# -----------------------------------------------------------------------------
# Pure-JAX reference (same math + same bf16 matmul precision) for correctness
# -----------------------------------------------------------------------------
def reference_forward(x, guide1, guide2, p, ctr, out):
    n, c, h, w = x.shape
    _, _, h2, w2 = guide2.shape
    x_up0 = bilinear_align_corners(x, h2, w2)
    x_up1 = bilinear_align_corners(guide1, h2, w2)
    g1d = bilinear_align_corners(guide1, h, w)
    g2d = bilinear_align_corners(guide2, h, w)
    x_cat = jnp.concatenate([g2d, g1d, x], 1).reshape(n, 3 * c, h * w)
    gl = jnp.concatenate([guide2, x_up1, x_up0], 1).reshape(n, 3 * c, h2 * w2)
    gd = jnp.concatenate([x_up1, x_up0], 1).reshape(n, 2 * c, h2 * w2)

    bf = jnp.bfloat16

    def cb(a, wk, bk, relu=True):
        y = jnp.einsum("oi,nil->nol", p[wk].astype(bf), a.astype(bf),
                       preferred_element_type=jnp.float32) + p[bk][None]
        return jnp.maximum(y, 0.0) if relu else y

    f_cat = cb(x_cat, "w_cat", "b_cat")                          # (n, OUT, HW)
    f_center = cb(cb(x_cat, "w_c1", "b_c1"), "w_c2", "b_c2", relu=False)
    f_center = jax.nn.softmax(f_center, axis=2)                  # over HW
    x_center = jnp.einsum("nol,ncl->noc", f_cat.astype(bf), f_center.astype(bf),
                          preferred_element_type=jnp.float32)    # (n, OUT, CTR)
    f_cat_avg = jnp.mean(f_cat, axis=2, keepdims=True)
    gl_conv = cb(gl, "w_a0l", "b_a0l")
    gd_conv = cb(gd, "w_a0d", "b_a0d")
    aff = lambda g: cb(cb(g + f_cat_avg, "w_a11", "b_a11"), "w_a12", "b_a12")
    f_aff_l, f_aff_d = aff(gl_conv), aff(gd_conv)
    na = ctr ** (-0.5)
    xu = lambda f: na * jnp.einsum("noc,ncl->nol", x_center.astype(bf),
                                   f.astype(bf),
                                   preferred_element_type=jnp.float32)
    x_up_l, x_up_d = xu(f_aff_l), xu(f_aff_d)

    def up(xv, gc):
        y = (jnp.einsum("oi,nil->nol", p["w_up_a"].astype(bf), xv.astype(bf),
                        preferred_element_type=jnp.float32)
             + jnp.einsum("oi,nil->nol", p["w_up_b"].astype(bf), gc.astype(bf),
                          preferred_element_type=jnp.float32)
             + p["b_up"][None])
        return jnp.maximum(y, 0.0)

    ol, od = up(x_up_l, gl_conv), up(x_up_d, gd_conv)
    reshape = lambda y: y.reshape(n, out, h2, w2)
    return reshape(ol), reshape(od)


if __name__ == "__main__":
    # Small shapes consistent with the module's forward.
    N, C = 2, 4                   # in_channels
    CTR, OUT = 8, 16              # center_channels, out_channels
    H, W = 8, 8                   # x spatial
    H1, W1 = 12, 12               # guide1 spatial
    H2, W2 = 16, 16               # guide2 spatial (output resolution)

    key = jax.random.PRNGKey(0)
    kx, k1, k2, kp = jax.random.split(key, 4)
    x = jax.random.normal(kx, (N, C, H, W), jnp.float32)
    guide1 = jax.random.normal(k1, (N, C, H1, W1), jnp.float32)
    guide2 = jax.random.normal(k2, (N, C, H2, W2), jnp.float32)

    params = make_params(kp, C, CTR, OUT)

    out_lane, out_drv = multi_hgd_forward(x, guide1, guide2, params, CTR, OUT)
    jax.block_until_ready((out_lane, out_drv))

    ref_lane, ref_drv = reference_forward(x, guide1, guide2, params, CTR, OUT)
    jax.block_until_ready((ref_lane, ref_drv))

    assert out_lane.shape == (N, OUT, H2, W2) and out_drv.shape == (N, OUT, H2, W2)
    # bf16 MXU inputs -> bf16-level tolerance (softmax and outputs are exact f32)
    assert jnp.allclose(out_lane, ref_lane, rtol=3e-2, atol=3e-2)
    assert jnp.allclose(out_drv, ref_drv, rtol=3e-2, atol=3e-2)

    print("KERNEL_OK")
</pallas_src>

<mosaic_0001>
module attributes {stable_mosaic.version = 11 : i64} {
  func.func @hgd_kernel_hw(%arg0: i32, %arg1: memref<1x4x64xbf16, #tpu.memory_space<vmem>>, %arg2: memref<1x4x64xbf16, #tpu.memory_space<vmem>>, %arg3: memref<1x4x64xbf16, #tpu.memory_space<vmem>>, %arg4: memref<24x12xbf16, #tpu.memory_space<vmem>>, %arg5: memref<24x1xf32, #tpu.memory_space<vmem>>, %arg6: memref<8x8xbf16, #tpu.memory_space<vmem>>, %arg7: memref<8x1xf32, #tpu.memory_space<vmem>>, %arg8: memref<1x16x8xf32, #tpu.memory_space<vmem>>, %arg9: memref<1x16x1xf32, #tpu.memory_space<vmem>>) attributes {dimension_semantics = [#tpu.dimension_semantics<parallel>], iteration_bounds = array<i64: 2>, scalar_prefetch = 0 : i64, scratch_operands = 0 : i64, tpu.core_type = #tpu.core_type<tc>, window_params = [{transform_indices = @transform_0, window_bounds = array<i64: 1, 4, 64>}, {transform_indices = @transform_1, window_bounds = array<i64: 1, 4, 64>}, {transform_indices = @transform_2, window_bounds = array<i64: 1, 4, 64>}, {pipeline_mode = #tpu.pipeline_mode<synchronous>, transform_indices = @transform_3, window_bounds = array<i64: 24, 12>}, {pipeline_mode = #tpu.pipeline_mode<synchronous>, transform_indices = @transform_4, window_bounds = array<i64: 24, 1>}, {pipeline_mode = #tpu.pipeline_mode<synchronous>, transform_indices = @transform_5, window_bounds = array<i64: 8, 8>}, {pipeline_mode = #tpu.pipeline_mode<synchronous>, transform_indices = @transform_6, window_bounds = array<i64: 8, 1>}, {transform_indices = @transform_7, window_bounds = array<i64: 1, 16, 8>}, {transform_indices = @transform_8, window_bounds = array<i64: 1, 16, 1>}]} {
    %c0 = arith.constant 0 : index
    %c0_0 = arith.constant 0 : index
    %0 = vector.load %arg4[%c0, %c0_0] : memref<24x12xbf16, #tpu.memory_space<vmem>>, vector<24x12xbf16>
    %1 = vector.extract_strided_slice %0 {offsets = [0, 0], sizes = [24, 4], strides = [1, 1]} : vector<24x12xbf16> to vector<24x4xbf16>
    %c0_1 = arith.constant 0 : index
    %c0_2 = arith.constant 0 : index
    %c0_3 = arith.constant 0 : index
    %2 = vector.load %arg1[%c0_1, %c0_2, %c0_3] : memref<1x4x64xbf16, #tpu.memory_space<vmem>>, vector<1x4x64xbf16>
    %3 = vector.shape_cast %2 : vector<1x4x64xbf16> to vector<4x64xbf16>
    %cst = arith.constant dense<0.000000e+00> : vector<24x64xf32>
    %4 = tpu.matmul %1, %3, %cst {dimension_numbers = #tpu.dot_dimension_numbers<[1], [0], [0], [1], [0, 0, 1, 1], [], []>} : vector<24x4xbf16>, vector<4x64xbf16>, vector<24x64xf32> -> vector<24x64xf32>
    %5 = vector.extract_strided_slice %0 {offsets = [0, 4], sizes = [24, 4], strides = [1, 1]} : vector<24x12xbf16> to vector<24x4xbf16>
    %c0_4 = arith.constant 0 : index
    %c0_5 = arith.constant 0 : index
    %c0_6 = arith.constant 0 : index
    %6 = vector.load %arg2[%c0_4, %c0_5, %c0_6] : memref<1x4x64xbf16, #tpu.memory_space<vmem>>, vector<1x4x64xbf16>
    %7 = vector.shape_cast %6 : vector<1x4x64xbf16> to vector<4x64xbf16>
    %cst_7 = arith.constant dense<0.000000e+00> : vector<24x64xf32>
    %8 = tpu.matmul %5, %7, %cst_7 {dimension_numbers = #tpu.dot_dimension_numbers<[1], [0], [0], [1], [0, 0, 1, 1], [], []>} : vector<24x4xbf16>, vector<4x64xbf16>, vector<24x64xf32> -> vector<24x64xf32>
    %9 = arith.addf %4, %8 : vector<24x64xf32>
    %10 = vector.extract_strided_slice %0 {offsets = [0, 8], sizes = [24, 4], strides = [1, 1]} : vector<24x12xbf16> to vector<24x4xbf16>
    %c0_8 = arith.constant 0 : index
    %c0_9 = arith.constant 0 : index
    %c0_10 = arith.constant 0 : index
    %11 = vector.load %arg3[%c0_8, %c0_9, %c0_10] : memref<1x4x64xbf16, #tpu.memory_space<vmem>>, vector<1x4x64xbf16>
    %12 = vector.shape_cast %11 : vector<1x4x64xbf16> to vector<4x64xbf16>
    %cst_11 = arith.constant dense<0.000000e+00> : vector<24x64xf32>
    %13 = tpu.matmul %10, %12, %cst_11 {dimension_numbers = #tpu.dot_dimension_numbers<[1], [0], [0], [1], [0, 0, 1, 1], [], []>} : vector<24x4xbf16>, vector<4x64xbf16>, vector<24x64xf32> -> vector<24x64xf32>
    %14 = arith.addf %9, %13 : vector<24x64xf32>
    %c0_12 = arith.constant 0 : index
    %c0_13 = arith.constant 0 : index
    %15 = vector.load %arg5[%c0_12, %c0_13] : memref<24x1xf32, #tpu.memory_space<vmem>>, vector<24x1xf32>
    %16 = vector.broadcast %15 : vector<24x1xf32> to vector<24x64xf32>
    %17 = arith.addf %14, %16 : vector<24x64xf32>
    %cst_14 = arith.constant 0.000000e+00 : f32
    %18 = vector.broadcast %cst_14 : f32 to vector<24x64xf32>
    %19 = arith.maximumf %17, %18 : vector<24x64xf32>
    %20 = vector.extract_strided_slice %19 {offsets = [0, 0], sizes = [16, 64], strides = [1, 1]} : vector<24x64xf32> to vector<16x64xf32>
    %21 = vector.extract_strided_slice %19 {offsets = [16, 0], sizes = [8, 64], strides = [1, 1]} : vector<24x64xf32> to vector<8x64xf32>
    %c0_15 = arith.constant 0 : index
    %c0_16 = arith.constant 0 : index
    %22 = vector.load %arg6[%c0_15, %c0_16] : memref<8x8xbf16, #tpu.memory_space<vmem>>, vector<8x8xbf16>
    %23 = arith.truncf %21 : vector<8x64xf32> to vector<8x64xbf16>
    %cst_17 = arith.constant dense<0.000000e+00> : vector<8x64xf32>
    %24 = tpu.matmul %22, %23, %cst_17 {dimension_numbers = #tpu.dot_dimension_numbers<[1], [0], [0], [1], [0, 0, 1, 1], [], []>} : vector<8x8xbf16>, vector<8x64xbf16>, vector<8x64xf32> -> vector<8x64xf32>
    %c0_18 = arith.constant 0 : index
    %c0_19 = arith.constant 0 : index
    %25 = vector.load %arg7[%c0_18, %c0_19] : memref<8x1xf32, #tpu.memory_space<vmem>>, vector<8x1xf32>
    %26 = vector.broadcast %25 : vector<8x1xf32> to vector<8x64xf32>
    %27 = arith.addf %24, %26 : vector<8x64xf32>
    %cst_20 = arith.constant dense<0xFF800000> : vector<8xf32>
    %28 = vector.multi_reduction <maximumf>, %27, %cst_20 [1] : vector<8x64xf32> to vector<8xf32>
    %29 = vector.shape_cast %28 : vector<8xf32> to vector<8x1xf32>
    %30 = vector.broadcast %29 : vector<8x1xf32> to vector<8x64xf32>
    %31 = arith.subf %27, %30 : vector<8x64xf32>
    %32 = math.exp %31 : vector<8x64xf32>
    %cst_21 = arith.constant dense<0.000000e+00> : vector<8xf32>
    %33 = vector.multi_reduction <add>, %32, %cst_21 [1] : vector<8x64xf32> to vector<8xf32>
    %34 = vector.shape_cast %33 : vector<8xf32> to vector<8x1xf32>
    %35 = vector.broadcast %34 : vector<8x1xf32> to vector<8x64xf32>
    %36 = arith.divf %32, %35 : vector<8x64xf32>
    %37 = arith.truncf %20 : vector<16x64xf32> to vector<16x64xbf16>
    %38 = arith.truncf %36 : vector<8x64xf32> to vector<8x64xbf16>
    %cst_22 = arith.constant dense<0.000000e+00> : vector<16x8xf32>
    %39 = tpu.matmul %37, %38, %cst_22 {dimension_numbers = #tpu.dot_dimension_numbers<[1], [1], [0], [0], [0, 0, 1, 0], [], []>} : vector<16x64xbf16>, vector<8x64xbf16>, vector<16x8xf32> -> vector<16x8xf32>
    %c0_23 = arith.constant 0 : index
    %c0_24 = arith.constant 0 : index
    %c0_25 = arith.constant 0 : index
    %40 = vector.load %arg8[%c0_23, %c0_24, %c0_25] : memref<1x16x8xf32, #tpu.memory_space<vmem>>, vector<1x16x8xf32>
    %41 = vector.shape_cast %40 : vector<1x16x8xf32> to vector<16x8xf32>
    %42 = vector.shape_cast %39 : vector<16x8xf32> to vector<1x16x8xf32>
    tpu.vector_store %arg8[%c0_23, %c0_24, %c0_25], %42 {strides = array<i32>} : memref<1x16x8xf32, #tpu.memory_space<vmem>>, vector<1x16x8xf32>,
    %cst_26 = arith.constant dense<0.000000e+00> : vector<16xf32>
    %43 = vector.multi_reduction <add>, %20, %cst_26 [1] : vector<16x64xf32> to vector<16xf32>
    %44 = vector.shape_cast %43 : vector<16xf32> to vector<16x1xf32>
    %cst_27 = arith.constant 6.400000e+01 : f32
    %45 = vector.broadcast %cst_27 : f32 to vector<16x1xf32>
    %46 = arith.divf %44, %45 : vector<16x1xf32>
    %c0_28 = arith.constant 0 : index
    %c0_29 = arith.constant 0 : index
    %c0_30 = arith.constant 0 : index
    %47 = vector.load %arg9[%c0_28, %c0_29, %c0_30] : memref<1x16x1xf32, #tpu.memory_space<vmem>>, vector<1x16x1xf32>
    %48 = vector.shape_cast %47 : vector<1x16x1xf32> to vector<16x1xf32>
    %49 = vector.shape_cast %46 : vector<16x1xf32> to vector<1x16x1xf32>
    tpu.vector_store %arg9[%c0_28, %c0_29, %c0_30], %49 {strides = array<i32>} : memref<1x16x1xf32, #tpu.memory_space<vmem>>, vector<1x16x1xf32>,
    return
  }
  func.func @transform_0(%arg0: i32) -> (i32, i32, i32) {
    %c0_i32 = arith.constant 0 : i32
    %c0_i32_0 = arith.constant 0 : i32
    %c0_i32_1 = arith.constant 0 : i32
    return %arg0, %c0_i32, %c0_i32_0 : i32, i32, i32
  }
  func.func @transform_1(%arg0: i32) -> (i32, i32, i32) {
    %c0_i32 = arith.constant 0 : i32
    %c0_i32_0 = arith.constant 0 : i32
    %c0_i32_1 = arith.constant 0 : i32
    return %arg0, %c0_i32, %c0_i32_0 : i32, i32, i32
  }
  func.func @transform_2(%arg0: i32) -> (i32, i32, i32) {
    %c0_i32 = arith.constant 0 : i32
    %c0_i32_0 = arith.constant 0 : i32
    %c0_i32_1 = arith.constant 0 : i32
    return %arg0, %c0_i32, %c0_i32_0 : i32, i32, i32
  }
  func.func @transform_3(%arg0: i32) -> (i32, i32) {
    %c0_i32 = arith.constant 0 : i32
    %c0_i32_0 = arith.constant 0 : i32
    %c0_i32_1 = arith.constant 0 : i32
    return %c0_i32, %c0_i32_0 : i32, i32
  }
  func.func @transform_4(%arg0: i32) -> (i32, i32) {
    %c0_i32 = arith.constant 0 : i32
    %c0_i32_0 = arith.constant 0 : i32
    %c0_i32_1 = arith.constant 0 : i32
    return %c0_i32, %c0_i32_0 : i32, i32
  }
  func.func @transform_5(%arg0: i32) -> (i32, i32) {
    %c0_i32 = arith.constant 0 : i32
    %c0_i32_0 = arith.constant 0 : i32
    %c0_i32_1 = arith.constant 0 : i32
    return %c0_i32, %c0_i32_0 : i32, i32
  }
  func.func @transform_6(%arg0: i32) -> (i32, i32) {
    %c0_i32 = arith.constant 0 : i32
    %c0_i32_0 = arith.constant 0 : i32
    %c0_i32_1 = arith.constant 0 : i32
    return %c0_i32, %c0_i32_0 : i32, i32
  }
  func.func @transform_7(%arg0: i32) -> (i32, i32, i32) {
    %c0_i32 = arith.constant 0 : i32
    %c0_i32_0 = arith.constant 0 : i32
    %c0_i32_1 = arith.constant 0 : i32
    return %arg0, %c0_i32, %c0_i32_0 : i32, i32, i32
  }
  func.func @transform_8(%arg0: i32) -> (i32, i32, i32) {
    %c0_i32 = arith.constant 0 : i32
    %c0_i32_0 = arith.constant 0 : i32
    %c0_i32_1 = arith.constant 0 : i32
    return %arg0, %c0_i32, %c0_i32_0 : i32, i32, i32
  }
}

</mosaic_0001>

<llo_original>
// kernel: tpu_custom_call.1
$region0: #{tpu_custom_call.1}
  #allocation0 [shape = 'u32[]', space=smem, size = 0x4, offset = 0x4, fixed_abs, tag = 'smem constant byte address 0x4 - core index']
  #allocation1 [shape = 'u32[144,128]{1,0:T(1,128)}', space=vmem, size = 0x12000, scoped, tag = 'internal scratch']
  %s0 = inlined_call_operand.vmem [shape: bf16[2,4,64], index: 0, kind: input, shape index: {}]
  %s1 = inlined_call_operand.vmem [shape: bf16[2,4,64], index: 1, kind: input, shape index: {}]
  %s2 = inlined_call_operand.vmem [shape: bf16[2,4,64], index: 2, kind: input, shape index: {}]
  %s3 = inlined_call_operand.vmem [shape: bf16[24,12], index: 3, kind: input, shape index: {}]
  %s4 = inlined_call_operand.vmem [shape: f32[24,1], index: 4, kind: input, shape index: {}]
  %s5 = inlined_call_operand.vmem [shape: bf16[8,8], index: 5, kind: input, shape index: {}]
  %s6 = inlined_call_operand.vmem [shape: f32[8,1], index: 6, kind: input, shape index: {}]
  %s7 = inlined_call_operand.vmem [shape: f32[2,16,8], index: 7, kind: output, shape index: {0}]
  %s8 = inlined_call_operand.vmem [shape: f32[2,16,1], index: 8, kind: output, shape index: {1}]
  %9 = xla_tuple %s7, %s8
  %s10 = sld [smem:[#allocation0]]
  $region69: #{tpu_custom_call.1} parent=0
    _
  %s12 = ssub.s32 1, %s10
  %s13 = scalar_select 0, %s12, %s10
  loop: start=0, step=1, limit=4
  $region2: #{tpu_custom_call.1} parent=0 // loop_pre_header
    _
  $region3: #{tpu_custom_call.1} parent=0 // loop_header
    %s15 = sphi 0, %s19
    %p16 = scmp.ge.s32.totalorder %s15, 4
    %s25 = sphi 0, %s27
    %s28 = sphi 0, %s25
    %s29 = sphi 0, %s28
    %s45 = sphi 0, %s29
    %s51 = sphi 0, %s53
    %s54 = sphi 0, %s51
    %s55 = sphi 0, %s54
    %s71 = sphi 0, %s55
    %s77 = sphi 0, %s79
    %s80 = sphi 0, %s77
    %s81 = sphi 0, %s80
    %s97 = sphi 0, %s81
    %s101 = sphi 0, %s101
    %s103 = sphi 0, %s101
    %s104 = sphi 0, %s103
    %s118 = sphi 0, %s104
    %s122 = sphi 0, %s122
    %s124 = sphi 0, %s122
    %s125 = sphi 0, %s124
    %s139 = sphi 0, %s125
    %s143 = sphi 0, %s143
    %s145 = sphi 0, %s143
    %s146 = sphi 0, %s145
    %s160 = sphi 0, %s146
    %s164 = sphi 0, %s164
    %s166 = sphi 0, %s164
    %s167 = sphi 0, %s166
    %s181 = sphi 0, %s167
    %s187 = sphi 0, %s189
    %s190 = sphi 0, %s187
    %s191 = sphi 0, %s190
    %s207 = sphi 0, %s191
    %s213 = sphi 0, %s215
    %s216 = sphi 0, %s213
    %s217 = sphi 0, %s216
    %s233 = sphi 0, %s217
  $region4: #{tpu_custom_call.1} parent=0 // loop_header_branch
    %18 = sbr.rel (%p16) target = $region8
  $region5: #{tpu_custom_call.1} parent=0 // loop_body
    %s20 = ssub.s32 %s15, 1
    %s21 = ssub.s32 %s15, 2
    %s22 = sadd.s32 %s15, 1
    %s23 = ssub.s32 %s15, %s22
    %p24 = scmp.eq.s32.totalorder %s23, 0
    %s26 = sadd.s32 %s25, 1
    %s27 = scalar_select %p24, %s25, %s26
    %p30 = pneg %p24
    %p31 = scmp.eq.s32.totalorder %s15, 1
    %p32 = por %p30, %p31
    %p33 = scmp.ne.s32.totalorder %s25, %s28
    %p34 = scmp.eq.s32.totalorder %s15, 0
    %p35 = por %p33, %p34
    %p36 = scmp.ne.s32.totalorder %s25, %s28
    %p37 = scmp.eq.s32.totalorder %s20, 1
    %p38 = por %p36, %p37
    %p39 = scmp.ne.s32.totalorder %s28, %s29
    %p40 = scmp.eq.s32.totalorder %s20, 0
    %p41 = por %p39, %p40
    %p42 = scmp.ne.s32.totalorder %s28, %s29
    %p43 = scmp.eq.s32.totalorder %s21, 1
    %p44 = por %p42, %p43
    %p46 = scmp.ne.s32.totalorder %s29, %s45
    %p47 = scmp.eq.s32.totalorder %s21, 0
    %p48 = por %p46, %p47
    %s49 = ssub.s32 %s15, %s22
    %p50 = scmp.eq.s32.totalorder %s49, 0
    %s52 = sadd.s32 %s51, 1
    %s53 = scalar_select %p50, %s51, %s52
    %p56 = pneg %p50
    %p57 = scmp.eq.s32.totalorder %s15, 1
    %p58 = por %p56, %p57
    %p59 = scmp.ne.s32.totalorder %s51, %s54
    %p60 = scmp.eq.s32.totalorder %s15, 0
    %p61 = por %p59, %p60
    %p62 = scmp.ne.s32.totalorder %s51, %s54
    %p63 = scmp.eq.s32.totalorder %s20, 1
    %p64 = por %p62, %p63
    %p65 = scmp.ne.s32.totalorder %s54, %s55
    %p66 = scmp.eq.s32.totalorder %s20, 0
    %p67 = por %p65, %p66
    %p68 = scmp.ne.s32.totalorder %s54, %s55
    %p69 = scmp.eq.s32.totalorder %s21, 1
    %p70 = por %p68, %p69
    %p72 = scmp.ne.s32.totalorder %s55, %s71
    %p73 = scmp.eq.s32.totalorder %s21, 0
    %p74 = por %p72, %p73
    %s75 = ssub.s32 %s15, %s22
    %p76 = scmp.eq.s32.totalorder %s75, 0
    %s78 = sadd.s32 %s77, 1
    %s79 = scalar_select %p76, %s77, %s78
    %p82 = pneg %p76
    %p83 = scmp.eq.s32.totalorder %s15, 1
    %p84 = por %p82, %p83
    %p85 = scmp.ne.s32.totalorder %s77, %s80
    %p86 = scmp.eq.s32.totalorder %s15, 0
    %p87 = por %p85, %p86
    %p88 = scmp.ne.s32.totalorder %s77, %s80
    %p89 = scmp.eq.s32.totalorder %s20, 1
    %p90 = por %p88, %p89
    %p91 = scmp.ne.s32.totalorder %s80, %s81
    %p92 = scmp.eq.s32.totalorder %s20, 0
    %p93 = por %p91, %p92
    %p94 = scmp.ne.s32.totalorder %s80, %s81
    %p95 = scmp.eq.s32.totalorder %s21, 1
    %p96 = por %p94, %p95
    %p98 = scmp.ne.s32.totalorder %s81, %s97
    %p99 = scmp.eq.s32.totalorder %s21, 0
    %p100 = por %p98, %p99
    %s102 = sadd.s32 %s101, 1
    %p105 = scmp.eq.s32.totalorder %s15, 1
    %p106 = scmp.ne.s32.totalorder %s101, %s103
    %p107 = scmp.eq.s32.totalorder %s15, 0
    %p108 = por %p106, %p107
    %p109 = scmp.ne.s32.totalorder %s101, %s103
    %p110 = scmp.eq.s32.totalorder %s20, 1
    %p111 = por %p109, %p110
    %p112 = scmp.ne.s32.totalorder %s103, %s104
    %p113 = scmp.eq.s32.totalorder %s20, 0
    %p114 = por %p112, %p113
    %p115 = scmp.ne.s32.totalorder %s103, %s104
    %p116 = scmp.eq.s32.totalorder %s21, 1
    %p117 = por %p115, %p116
    %p119 = scmp.ne.s32.totalorder %s104, %s118
    %p120 = scmp.eq.s32.totalorder %s21, 0
    %p121 = por %p119, %p120
    %s123 = sadd.s32 %s122, 1
    %p126 = scmp.eq.s32.totalorder %s15, 1
    %p127 = scmp.ne.s32.totalorder %s122, %s124
    %p128 = scmp.eq.s32.totalorder %s15, 0
    %p129 = por %p127, %p128
    %p130 = scmp.ne.s32.totalorder %s122, %s124
    %p131 = scmp.eq.s32.totalorder %s20, 1
    %p132 = por %p130, %p131
    %p133 = scmp.ne.s32.totalorder %s124, %s125
    %p134 = scmp.eq.s32.totalorder %s20, 0
    %p135 = por %p133, %p134
    %p136 = scmp.ne.s32.totalorder %s124, %s125
    %p137 = scmp.eq.s32.totalorder %s21, 1
    %p138 = por %p136, %p137
    %p140 = scmp.ne.s32.totalorder %s125, %s139
    %p141 = scmp.eq.s32.totalorder %s21, 0
    %p142 = por %p140, %p141
    %s144 = sadd.s32 %s143, 1
    %p147 = scmp.eq.s32.totalorder %s15, 1
    %p148 = scmp.ne.s32.totalorder %s143, %s145
    %p149 = scmp.eq.s32.totalorder %s15, 0
    %p150 = por %p148, %p149
    %p151 = scmp.ne.s32.totalorder %s143, %s145
    %p152 = scmp.eq.s32.totalorder %s20, 1
    %p153 = por %p151, %p152
    %p154 = scmp.ne.s32.totalorder %s145, %s146
    %p155 = scmp.eq.s32.totalorder %s20, 0
    %p156 = por %p154, %p155
    %p157 = scmp.ne.s32.totalorder %s145, %s146
    %p158 = scmp.eq.s32.totalorder %s21, 1
    %p159 = por %p157, %p158
    %p161 = scmp.ne.s32.totalorder %s146, %s160
    %p162 = scmp.eq.s32.totalorder %s21, 0
    %p163 = por %p161, %p162
    %s165 = sadd.s32 %s164, 1
    %p168 = scmp.eq.s32.totalorder %s15, 1
    %p169 = scmp.ne.s32.totalorder %s164, %s166
    %p170 = scmp.eq.s32.totalorder %s15, 0
    %p171 = por %p169, %p170
    %p172 = scmp.ne.s32.totalorder %s164, %s166
    %p173 = scmp.eq.s32.totalorder %s20, 1
    %p174 = por %p172, %p173
    %p175 = scmp.ne.s32.totalorder %s166, %s167
    %p176 = scmp.eq.s32.totalorder %s20, 0
    %p177 = por %p175, %p176
    %p178 = scmp.ne.s32.totalorder %s166, %s167
    %p179 = scmp.eq.s32.totalorder %s21, 1
    %p180 = por %p178, %p179
    %p182 = scmp.ne.s32.totalorder %s167, %s181
    %p183 = scmp.eq.s32.totalorder %s21, 0
    %p184 = por %p182, %p183
    %s185 = ssub.s32 %s15, %s22
    %p186 = scmp.eq.s32.totalorder %s185, 0
    %s188 = sadd.s32 %s187, 1
    %s189 = scalar_select %p186, %s187, %s188
    %p192 = pneg %p186
    %p193 = scmp.eq.s32.totalorder %s15, 1
    %p194 = por %p192, %p193
    %p195 = scmp.ne.s32.totalorder %s187, %s190
    %p196 = scmp.eq.s32.totalorder %s15, 0
    %p197 = por %p195, %p196
    %p198 = scmp.ne.s32.totalorder %s187, %s190
    %p199 = scmp.eq.s32.totalorder %s20, 1
    %p200 = por %p198, %p199
    %p201 = scmp.ne.s32.totalorder %s190, %s191
    %p202 = scmp.eq.s32.totalorder %s20, 0
    %p203 = por %p201, %p202
    %p204 = scmp.ne.s32.totalorder %s190, %s191
    %p205 = scmp.eq.s32.totalorder %s21, 1
    %p206 = por %p204, %p205
    %p208 = scmp.ne.s32.totalorder %s191, %s207
    %p209 = scmp.eq.s32.totalorder %s21, 0
    %p210 = por %p208, %p209
    %s211 = ssub.s32 %s15, %s22
    %p212 = scmp.eq.s32.totalorder %s211, 0
    %s214 = sadd.s32 %s213, 1
    %s215 = scalar_select %p212, %s213, %s214
    %p218 = pneg %p212
    %p219 = scmp.eq.s32.totalorder %s15, 1
    %p220 = por %p218, %p219
    %p221 = scmp.ne.s32.totalorder %s213, %s216
    %p222 = scmp.eq.s32.totalorder %s15, 0
    %p223 = por %p221, %p222
    %p224 = scmp.ne.s32.totalorder %s213, %s216
    %p225 = scmp.eq.s32.totalorder %s20, 1
    %p226 = por %p224, %p225
    %p227 = scmp.ne.s32.totalorder %s216, %s217
    %p228 = scmp.eq.s32.totalorder %s20, 0
    %p229 = por %p227, %p228
    %p230 = scmp.ne.s32.totalorder %s216, %s217
    %p231 = scmp.eq.s32.totalorder %s21, 1
    %p232 = por %p230, %p231
    %p234 = scmp.ne.s32.totalorder %s217, %s233
    %p235 = scmp.eq.s32.totalorder %s21, 0
    %p236 = por %p234, %p235
    %p237 = scmp.le.s32.totalorder 1, %s15
    %p238 = scmp.lt.s32.totalorder %s15, 3
    %p239 = pnand %p237, %p238
    %p240 = pneg %p239
    // Predicated region
    $region9: #{tpu_custom_call.1} parent=5 // pred_check
      _
    $region10: #{tpu_custom_call.1} parent=5 // pred_check_branch
      %242 = sbr.rel (%p239) target = $region12
    $region11: #{tpu_custom_call.1} parent=5 // pred_region
      %s243 = ssub.s32 %s15, 1
      // Predicated region
      $region13: #{tpu_custom_call.1} parent=11 // pred_check
        %p244 = pneg %p114
      $region14: #{tpu_custom_call.1} parent=11 // pred_check_branch
        %246 = sbr.rel (%p244) target = $region16
      $region15: #{tpu_custom_call.1} parent=11 // pred_region
        _
      $region16: #{tpu_custom_call.1} parent=11 // pred_fallthru
        _
      // Predicated region
      $region17: #{tpu_custom_call.1} parent=11 // pred_check
        %p247 = pneg %p135
      $region18: #{tpu_custom_call.1} parent=11 // pred_check_branch
        %249 = sbr.rel (%p247) target = $region20
      $region19: #{tpu_custom_call.1} parent=11 // pred_region
        _
      $region20: #{tpu_custom_call.1} parent=11 // pred_fallthru
        _
      // Predicated region
      $region21: #{tpu_custom_call.1} parent=11 // pred_check
        %p250 = pneg %p156
      $region22: #{tpu_custom_call.1} parent=11 // pred_check_branch
        %252 = sbr.rel (%p250) target = $region24
      $region23: #{tpu_custom_call.1} parent=11 // pred_region
        _
      $region24: #{tpu_custom_call.1} parent=11 // pred_fallthru
        _
      // Predicated region
      $region25: #{tpu_custom_call.1} parent=11 // pred_check
        %p253 = pneg %p177
      $region26: #{tpu_custom_call.1} parent=11 // pred_check_branch
        %255 = sbr.rel (%p253) target = $region28
      $region27: #{tpu_custom_call.1} parent=11 // pred_region
        _
      $region28: #{tpu_custom_call.1} parent=11 // pred_fallthru
        _
    $region12: #{tpu_custom_call.1} parent=5 // pred_fallthru
      _
    %p256 = scmp.lt.s32.totalorder %s15, 2
    // Predicated region
    $region29: #{tpu_custom_call.1} parent=5 // pred_check
      %p257 = pneg %p256
    $region30: #{tpu_custom_call.1} parent=5 // pred_check_branch
      %259 = sbr.rel (%p257) target = $region32
    $region31: #{tpu_custom_call.1} parent=5 // pred_region
      // Predicated region
      $region33: #{tpu_custom_call.1} parent=31 // pred_check
        %p260 = pneg %p35
      $region34: #{tpu_custom_call.1} parent=31 // pred_check_branch
        %262 = sbr.rel (%p260) target = $region36
      $region35: #{tpu_custom_call.1} parent=31 // pred_region
        %p263 = scmp.lt.s32.totalorder %s15, 1
        %s264 = scalar_select %p263, %s15, 1
        %s265 = smul.addr %s264, 2
        %s266 = scalar_lea.vmem %s0, %s265
      $region36: #{tpu_custom_call.1} parent=31 // pred_fallthru
        _
      // Predicated region
      $region37: #{tpu_custom_call.1} parent=31 // pred_check
        %p267 = pneg %p61
      $region38: #{tpu_custom_call.1} parent=31 // pred_check_branch
        %269 = sbr.rel (%p267) target = $region40
      $region39: #{tpu_custom_call.1} parent=31 // pred_region
        %p270 = scmp.lt.s32.totalorder %s15, 1
        %s271 = scalar_select %p270, %s15, 1
        %s272 = smul.addr %s271, 2
        %s273 = scalar_lea.vmem %s1, %s272
      $region40: #{tpu_custom_call.1} parent=31 // pred_fallthru
        _
      // Predicated region
      $region41: #{tpu_custom_call.1} parent=31 // pred_check
        %p274 = pneg %p87
      $region42: #{tpu_custom_call.1} parent=31 // pred_check_branch
        %276 = sbr.rel (%p274) target = $region44
      $region43: #{tpu_custom_call.1} parent=31 // pred_region
        %p277 = scmp.lt.s32.totalorder %s15, 1
        %s278 = scalar_select %p277, %s15, 1
        %s279 = smul.addr %s278, 2
        %s280 = scalar_lea.vmem %s2, %s279
      $region44: #{tpu_custom_call.1} parent=31 // pred_fallthru
        _
    $region32: #{tpu_custom_call.1} parent=5 // pred_fallthru
      _
    %p281 = scmp.le.s32.totalorder 1, %s15
    %p282 = scmp.lt.s32.totalorder %s15, 3
    %p283 = pnand %p281, %p282
    %p284 = pneg %p283
    // Predicated region
    $region45: #{tpu_custom_call.1} parent=5 // pred_check
      _
    $region46: #{tpu_custom_call.1} parent=5 // pred_check_branch
      %286 = sbr.rel (%p283) target = $region48
    $region47: #{tpu_custom_call.1} parent=5 // pred_region
      %s287 = ssub.s32 %s15, 1
      %p288 = scmp.lt.s32.totalorder %s20, 1
      %s289 = scalar_select %p288, %s20, 1
      %s290 = smul.addr %s289, 2
      %s291 = scalar_lea.vmem %s0, %s290
      %p292 = pneg %p41
      %p293 = pneg %p38
      %p294 = scmp.lt.s32.totalorder %s20, 1
      %s295 = scalar_select %p294, %s20, 1
      %s296 = smul.addr %s295, 2
      %s297 = scalar_lea.vmem %s1, %s296
      %p298 = pneg %p67
      %p299 = pneg %p64
      %p300 = scmp.lt.s32.totalorder %s20, 1
      %s301 = scalar_select %p300, %s20, 1
      %s302 = smul.addr %s301, 2
      %s303 = scalar_lea.vmem %s2, %s302
      %p304 = pneg %p93
      %p305 = pneg %p90
      %p306 = pneg %p114
      %p307 = pneg %p111
      %p308 = pneg %p135
      %p309 = pneg %p132
      %p310 = pneg %p156
      %p311 = pneg %p153
      %p312 = pneg %p177
      %p313 = pneg %p174
      %p314 = pneg %p203
      %p315 = pneg %p200
      %p316 = scmp.lt.s32.totalorder %s20, 1
      %s317 = scalar_select %p316, %s20, 1
      %s318 = smul.addr %s317, 2
      %s319 = smul.addr %s318, 8
      %s320 = scalar_lea.vmem %s7, %s319
      %p321 = pneg %p229
      %p322 = pneg %p226
      %p323 = scmp.lt.s32.totalorder %s20, 1
      %s324 = scalar_select %p323, %s20, 1
      %s325 = smul.addr %s324, 2
      %s326 = smul.addr %s325, 8
      %s327 = scalar_lea.vmem %s8, %s326
      %p328 = scmp.lt.s32.totalorder %s20, 1
      %s329 = scalar_select %p328, %s20, 1
      %s330 = smul.addr %s329, 2
      %s331 = scalar_lea.vmem %s0, %s330
      %p332 = scmp.lt.s32.totalorder %s20, 1
      %s333 = scalar_select %p332, %s20, 1
      %s334 = smul.addr %s333, 2
      %s335 = scalar_lea.vmem %s1, %s334
      %p336 = scmp.lt.s32.totalorder %s20, 1
      %s337 = scalar_select %p336, %s20, 1
      %s338 = smul.addr %s337, 2
      %s339 = scalar_lea.vmem %s2, %s338
      %p340 = scmp.lt.s32.totalorder %s20, 1
      %s341 = scalar_select %p340, %s20, 1
      %s342 = smul.addr %s341, 2
      %s343 = smul.addr %s342, 8
      %s344 = scalar_lea.vmem %s7, %s343
      %p345 = scmp.lt.s32.totalorder %s20, 1
      %s346 = scalar_select %p345, %s20, 1
      %s347 = smul.addr %s346, 2
      %s348 = smul.addr %s347, 8
      %s349 = scalar_lea.vmem %s8, %s348
      %v351 = vld [vmem:[%s3] sm:$0xf]
      %v352 = vld [vmem:[%s3 + $0x4] sm:$0xf]
      %v353 = vld [vmem:[%s3 + $0x8] sm:$0xf]
      %v354 = vld [vmem:[%s331] sm:$0x3]
      %v355 = vld [vmem:[%s335] sm:$0x3]
      %v359 = vunpack.c.l.b16 %v351
      %v360 = vunpack.c.l.b16 %v352
      %v361 = vunpack.c.l.b16 %v353
      %v362 = vpack.c.b16 %v360, %v359
      %v363 = vpack.c.b16 %v361, %v361
      %364 = vrot.lane.b32.xlu0 %v362, 124
      %v365 = vpop.permute.xlu0 %364
      %366 = vrot.lane.b32.xlu0 %v363, 124
      %v367 = vpop.permute.xlu0 %366
      %vm368 = vcmask 31744
      %v370 = vsel %vm368, %v365, 0
      %v373 = vsel %vm368, %v367, 0
      %vm375 = vcmask 1041408
      %v377 = vsel %vm375, %v355, 0
      %379 = vmatprep.subr.bf16.mxu0 0
      %380 = vmatpush1.bf16.msra.mxu0 0
      %381 = vmatprep.subr.bf16.mxu0 0
      %382 = vmatpush1.bf16.msra.mxu0 0
      %383 = vmatprep.subr.bf16.mxu0 0
      %384 = vmatpush1.bf16.msra.mxu0 0
      %385 = vmatprep.subr.bf16.mxu0 0
      %386 = vmatpush1.bf16.msra.mxu0 0
      %387 = vmatprep.subr.bf16.mxu0 0
      %388 = vmatpush1.bf16.msra.mxu0 0
      %389 = vmatprep.subr.bf16.mxu0 0
      %390 = vmatpush1.bf16.msra.mxu0 0
      %391 = vmatprep.subr.bf16.mxu0 0
      %392 = vmatpush1.bf16.msra.mxu0 0
      %393 = vmatprep.subr.bf16.mxu0 0
      %394 = vmatpush1.bf16.msra.mxu0 %v377
      %395 = vmatprep.subr.bf16.mxu0 0
      %396 = vmatpush2.bf16.msra.mxu0 0
      %397 = vmatprep.subr.bf16.mxu0 0
      %398 = vmatpush2.bf16.msra.mxu0 0
      %399 = vmatprep.subr.bf16.mxu0 0
      %400 = vmatpush2.bf16.msra.mxu0 0
      %401 = vmatprep.subr.bf16.mxu0 0
      %402 = vmatpush2.bf16.msra.mxu0 0
      %403 = vmatprep.subr.bf16.mxu0 0
      %404 = vmatpush2.bf16.msra.mxu0 0
      %405 = vmatprep.subr.bf16.mxu0 0
      %406 = vmatpush2.bf16.msra.mxu0 0
      %407 = vmatprep.subr.bf16.mxu0 0
      %408 = vmatpush2.bf16.msra.mxu0 0
      %409 = vmatprep.subr.bf16.mxu0 0
      %410 = vmatpush2.bf16.msra.mxu0 0
      %411 = vmatprep.mubr.bf16.mxu0 0
      %412 = vmatmul.mubr.bf16.gmra.mxu0 %v370
      %v413 = vpop.f32.mrf.mxu0
      %v414 = vadd.f32 0.0, %v413
      %v415 = vpop.f32.mrf.mxu0
      %v416 = vpop.f32.mrf.mxu0
      %v417 = vadd.f32 0.0, %v416
      %v418 = vpop.f32.mrf.mxu0
      %419 = vmatprep.mubr.bf16.mxu0 0
      %420 = vmatmul.mubr.bf16.gmra.mxu0 %v373
      %v421 = vpop.f32.mrf.mxu0
      %v422 = vadd.f32 0.0, %v421
      %v423 = vpop.f32.mrf.mxu0
      %v424 = vpop.f32.mrf.mxu0
      %v425 = vpop.f32.mrf.mxu0
      %426 = vdwg.mxu0
      %v428 = vsel %vm368, %v362, 0
      %v431 = vsel %vm368, %v363, 0
      %v434 = vsel %vm375, %v354, 0
      %436 = vmatprep.subr.bf16.mxu0 0
      %437 = vmatpush1.bf16.msra.mxu0 0
      %438 = vmatprep.subr.bf16.mxu0 0
      %439 = vmatpush1.bf16.msra.mxu0 0
      %440 = vmatprep.subr.bf16.mxu0 0
      %441 = vmatpush1.bf16.msra.mxu0 0
      %442 = vmatprep.subr.bf16.mxu0 0
      %443 = vmatpush1.bf16.msra.mxu0 0
      %444 = vmatprep.subr.bf16.mxu0 0
      %445 = vmatpush1.bf16.msra.mxu0 0
      %446 = vmatprep.subr.bf16.mxu0 0
      %447 = vmatpush1.bf16.msra.mxu0 0
      %448 = vmatprep.subr.bf16.mxu0 0
      %449 = vmatpush1.bf16.msra.mxu0 0
      %450 = vmatprep.subr.bf16.mxu0 0
      %451 = vmatpush1.bf16.msra.mxu0 %v434
      %452 = vmatprep.subr.bf16.mxu0 0
      %453 = vmatpush2.bf16.msra.mxu0 0
      %454 = vmatprep.subr.bf16.mxu0 0
      %455 = vmatpush2.bf16.msra.mxu0 0
      %456 = vmatprep.subr.bf16.mxu0 0
      %457 = vmatpush2.bf16.msra.mxu0 0
      %458 = vmatprep.subr.bf16.mxu0 0
      %459 = vmatpush2.bf16.msra.mxu0 0
      %460 = vmatprep.subr.bf16.mxu0 0
      %461 = vmatpush2.bf16.msra.mxu0 0
      %462 = vmatprep.subr.bf16.mxu0 0
      %463 = vmatpush2.bf16.msra.mxu0 0
      %464 = vmatprep.subr.bf16.mxu0 0
      %465 = vmatpush2.bf16.msra.mxu0 0
      %466 = vmatprep.subr.bf16.mxu0 0
      %467 = vmatpush2.bf16.msra.mxu0 0
      %468 = vmatprep.mubr.bf16.mxu0 0
      %469 = vmatmul.mubr.bf16.gmra.mxu0 %v428
      %v470 = vpop.f32.mrf.mxu0
      %v471 = vadd.f32 %v414, %v470
      %v472 = vpop.f32.mrf.mxu0
      %v473 = vpop.f32.mrf.mxu0
      %v474 = vadd.f32 %v417, %v473
      %v475 = vpop.f32.mrf.mxu0
      %476 = vmatprep.mubr.bf16.mxu0 0
      %477 = vmatmul.mubr.bf16.gmra.mxu0 %v431
      %v478 = vpop.f32.mrf.mxu0
      %v479 = vadd.f32 %v422, %v478
      %v480 = vpop.f32.mrf.mxu0
      %v481 = vpop.f32.mrf.mxu0
      %v482 = vpop.f32.mrf.mxu0
      %483 = vdwg.mxu0
      %v484 = vld [vmem:[%s339] sm:$0x3]
      %485 = vrot.lane.b32.xlu0 %v362, 120
      %v486 = vpop.permute.xlu0 %485
      %487 = vrot.lane.b32.xlu0 %v363, 120
      %v488 = vpop.permute.xlu0 %487
      %v490 = vsel %vm368, %v486, 0
      %v493 = vsel %vm368, %v488, 0
      %v496 = vsel %vm375, %v484, 0
      %498 = vmatprep.subr.bf16.mxu0 0
      %499 = vmatpush1.bf16.msra.mxu0 0
      %500 = vmatprep.subr.bf16.mxu0 0
      %501 = vmatpush1.bf16.msra.mxu0 0
      %502 = vmatprep.subr.bf16.mxu0 0
      %503 = vmatpush1.bf16.msra.mxu0 0
      %504 = vmatprep.subr.bf16.mxu0 0
      %505 = vmatpush1.bf16.msra.mxu0 0
      %506 = vmatprep.subr.bf16.mxu0 0
      %507 = vmatpush1.bf16.msra.mxu0 0
      %508 = vmatprep.subr.bf16.mxu0 0
      %509 = vmatpush1.bf16.msra.mxu0 0
      %510 = vmatprep.subr.bf16.mxu0 0
      %511 = vmatpush1.bf16.msra.mxu0 0
      %512 = vmatprep.subr.bf16.mxu0 0
      %513 = vmatpush1.bf16.msra.mxu0 %v496
      %514 = vmatprep.subr.bf16.mxu0 0
      %515 = vmatpush2.bf16.msra.mxu0 0
      %516 = vmatprep.subr.bf16.mxu0 0
      %517 = vmatpush2.bf16.msra.mxu0 0
      %518 = vmatprep.subr.bf16.mxu0 0
      %519 = vmatpush2.bf16.msra.mxu0 0
      %520 = vmatprep.subr.bf16.mxu0 0
      %521 = vmatpush2.bf16.msra.mxu0 0
      %522 = vmatprep.subr.bf16.mxu0 0
      %523 = vmatpush2.bf16.msra.mxu0 0
      %524 = vmatprep.subr.bf16.mxu0 0
      %525 = vmatpush2.bf16.msra.mxu0 0
      %526 = vmatprep.subr.bf16.mxu0 0
      %527 = vmatpush2.bf16.msra.mxu0 0
      %528 = vmatprep.subr.bf16.mxu0 0
      %529 = vmatpush2.bf16.msra.mxu0 0
      %530 = vmatprep.mubr.bf16.mxu0 0
      %531 = vmatmul.mubr.bf16.gmra.mxu0 %v490
      %v532 = vpop.f32.mrf.mxu0
      %v533 = vadd.f32 0.0, %v532
      %v534 = vpop.f32.mrf.mxu0
      %v535 = vpop.f32.mrf.mxu0
      %v536 = vadd.f32 0.0, %v535
      %v537 = vpop.f32.mrf.mxu0
      %538 = vmatprep.mubr.bf16.mxu0 0
      %539 = vmatmul.mubr.bf16.gmra.mxu0 %v493
      %v540 = vpop.f32.mrf.mxu0
      %v541 = vadd.f32 0.0, %v540
      %v542 = vpop.f32.mrf.mxu0
      %v543 = vpop.f32.mrf.mxu0
      %v544 = vpop.f32.mrf.mxu0
      %545 = vdwg.mxu0
      %v546 = vadd.f32 %v471, %v533
      %v547 = vadd.f32 %v474, %v536
      %v548 = vadd.f32 %v479, %v541
      %v549 = vld [vmem:[%s4] sm:$0xff]
      %v550 = vld [vmem:[%s4 + $0x8] sm:$0xff]
      %v551 = vld [vmem:[%s4 + $0x10] sm:$0xff]
      %553 = vset.pattern.permute.xlu0 0
      %554 = vperm.xlu0 %553, %v549
      %v555 = vpop.permute.xlu0 %554
      %558 = vset.pattern.permute.xlu0 0
      %559 = vperm.xlu0 %558, %v550
      %v560 = vpop.permute.xlu0 %559
      %563 = vset.pattern.permute.xlu0 0
      %564 = vperm.xlu0 %563, %v551
      %v565 = vpop.permute.xlu0 %564
      %v567 = vadd.f32 %v546, %v555
      %v568 = vadd.f32 %v547, %v560
      %v569 = vadd.f32 %v548, %v565
      %v570 = vmax.f32 %v567, 0.0
      %v571 = vmax.f32 %v568, 0.0
      %v572 = vmax.f32 %v569, 0.0
      %v573 = vld [vmem:[%s5] sm:$0xf]
      %v574 = vpack.c.bf16 %v572, %v572
      %v575 = vld [vmem:[%s6] sm:$0xff]
      %577 = vset.pattern.permute.xlu0 0
      %578 = vperm.xlu0 %577, %v575
      %v579 = vpop.permute.xlu0 %578
      %vm581 = vcmask 64512
      %v583 = vsel %vm581, %v573, 0
      %vm585 = vcmask 1043456
      %v587 = vsel %vm585, %v574, 0
      %589 = vmatprep.subr.bf16.mxu0 0
      %590 = vmatpush1.bf16.msra.mxu0 0
      %591 = vmatprep.subr.bf16.mxu0 0
      %592 = vmatpush1.bf16.msra.mxu0 0
      %593 = vmatprep.subr.bf16.mxu0 0
      %594 = vmatpush1.bf16.msra.mxu0 0
      %595 = vmatprep.subr.bf16.mxu0 0
      %596 = vmatpush1.bf16.msra.mxu0 0
      %597 = vmatprep.subr.bf16.mxu0 0
      %598 = vmatpush1.bf16.msra.mxu0 0
      %599 = vmatprep.subr.bf16.mxu0 0
      %600 = vmatpush1.bf16.msra.mxu0 0
      %601 = vmatprep.subr.bf16.mxu0 0
      %602 = vmatpush1.bf16.msra.mxu0 0
      %603 = vmatprep.subr.bf16.mxu0 0
      %604 = vmatpush1.bf16.msra.mxu0 %v587
      %605 = vmatprep.subr.bf16.mxu0 0
      %606 = vmatpush2.bf16.msra.mxu0 0
      %607 = vmatprep.subr.bf16.mxu0 0
      %608 = vmatpush2.bf16.msra.mxu0 0
      %609 = vmatprep.subr.bf16.mxu0 0
      %610 = vmatpush2.bf16.msra.mxu0 0
      %611 = vmatprep.subr.bf16.mxu0 0
      %612 = vmatpush2.bf16.msra.mxu0 0
      %613 = vmatprep.subr.bf16.mxu0 0
      %614 = vmatpush2.bf16.msra.mxu0 0
      %615 = vmatprep.subr.bf16.mxu0 0
      %616 = vmatpush2.bf16.msra.mxu0 0
      %617 = vmatprep.subr.bf16.mxu0 0
      %618 = vmatpush2.bf16.msra.mxu0 0
      %619 = vmatprep.subr.bf16.mxu0 0
      %620 = vmatpush2.bf16.msra.mxu0 0
      %621 = vmatprep.mubr.bf16.mxu0 0
      %622 = vmatmul.mubr.bf16.gmra.mxu0 %v583
      %v623 = vpop.f32.mrf.mxu0
      %v624 = vadd.f32 %v579, %v623
      %v625 = vpop.f32.mrf.mxu0
      %v626 = vpop.f32.mrf.mxu0
      %v627 = vpop.f32.mrf.mxu0
      %628 = vdwg.mxu0
      %vm629 = vcmask 523264
      %v630 = vsel %vm629, %v624, -inf
      %631 = vmax.xlane.f32.xlu0 %v630
      %v632 = vpop.xlane.xlu0 %631
      %v633 = vsub.f32 %v624, %v632
      %v634 = vmul.f32 %v633, 1.442695
      %v635 = vpow.pop %v634
      %v636 = vsel %vm629, %v635, 0.0
      %637 = vadd.xlane.f32.xlu0 %v636
      %v638 = vpop.xlane.xlu0 %637
      %v639 = vrcp.pop %v638
      %v640 = vmul.f32 %v635, %v639
      %v641 = vpack.c.bf16 %v571, %v570
      %v642 = vpack.c.bf16 %v640, %v640
      %v644 = vsel %vm629, %v641, 0
      %v647 = vsel %vm629, %v642, 0
      %649 = vmatprep.subr.bf16.mxu0 0
      %650 = vmatpush1.bf16.xpose.msra.mxu0 0
      %651 = vmatprep.subr.bf16.mxu0 0
      %652 = vmatpush1.bf16.xpose.msra.mxu0 0
      %653 = vmatprep.subr.bf16.mxu0 0
      %654 = vmatpush1.bf16.xpose.msra.mxu0 0
      %655 = vmatprep.subr.bf16.mxu0 0
      %656 = vmatpush1.bf16.xpose.msra.mxu0 0
      %657 = vmatprep.subr.bf16.mxu0 0
      %658 = vmatpush1.bf16.xpose.msra.mxu0 0
      %659 = vmatprep.subr.bf16.mxu0 0
      %660 = vmatpush1.bf16.xpose.msra.mxu0 0
      %661 = vmatprep.subr.bf16.mxu0 0
      %662 = vmatpush1.bf16.xpose.msra.mxu0 0
      %663 = vmatprep.subr.bf16.mxu0 0
      %664 = vmatpush1.bf16.xpose.msra.mxu0 %v647
      %665 = vmatprep.subr.bf16.mxu0 0
      %666 = vmatpush2.bf16.xpose.msra.mxu0 0
      %667 = vmatprep.subr.bf16.mxu0 0
      %668 = vmatpush2.bf16.xpose.msra.mxu0 0
      %669 = vmatprep.subr.bf16.mxu0 0
      %670 = vmatpush2.bf16.xpose.msra.mxu0 0
      %671 = vmatprep.subr.bf16.mxu0 0
      %672 = vmatpush2.bf16.xpose.msra.mxu0 0
      %673 = vmatprep.subr.bf16.mxu0 0
      %674 = vmatpush2.bf16.xpose.msra.mxu0 0
      %675 = vmatprep.subr.bf16.mxu0 0
      %676 = vmatpush2.bf16.xpose.msra.mxu0 0
      %677 = vmatprep.subr.bf16.mxu0 0
      %678 = vmatpush2.bf16.xpose.msra.mxu0 0
      %679 = vmatprep.subr.bf16.mxu0 0
      %680 = vmatpush2.bf16.xpose.msra.mxu0 0
      %681 = vmatprep.mubr.bf16.mxu0 0
      %682 = vmatmul.mubr.bf16.gmra.mxu0 %v644
      %v683 = vpop.f32.mrf.mxu0
      %v684 = vadd.f32 0.0, %v683
      %v685 = vpop.f32.mrf.mxu0
      %v686 = vpop.f32.mrf.mxu0
      %v687 = vadd.f32 0.0, %v686
      %v688 = vpop.f32.mrf.mxu0
      %689 = vdwg.mxu0
      %690 = vst.msk [vmem:[%s344] sm:$0xff] %vm581, %v684
      %691 = vst.msk [vmem:[%s344 + $0x8] sm:$0xff] %vm581, %v687
      %v692 = vsel %vm629, %v570, 0.0
      %693 = vadd.xlane.f32.xlu0 %v692
      %v694 = vpop.xlane.xlu0 %693
      %v695 = vsel %vm629, %v571, 0.0
      %696 = vadd.xlane.f32.xlu0 %v695
      %v697 = vpop.xlane.xlu0 %696
      %v698 = vrcp.pop 64.0
      %v699 = vmul.f32 %v694, %v698
      %v700 = vmul.f32 %v697, %v698
      %vm701 = vcmask 7168
      %702 = vst.msk [vmem:[%s349] sm:$0xff] %vm701, %v699
      %703 = vst.msk [vmem:[%s349 + $0x8] sm:$0xff] %vm701, %v700
      %p704 = scmp.lt.s32.totalorder %s20, 1
      %s705 = scalar_select %p704, %s20, 1
      %s706 = smul.addr %s705, 2
      %s707 = smul.addr %s706, 8
      %s708 = scalar_lea.vmem %s7, %s707
      %p709 = scmp.lt.s32.totalorder %s20, 1
      %s710 = scalar_select %p709, %s20, 1
      %s711 = smul.addr %s710, 2
      %s712 = smul.addr %s711, 8
      %s713 = scalar_lea.vmem %s8, %s712
      // Predicated region
      $region49: #{tpu_custom_call.1} parent=47 // pred_check
        %p714 = pneg %p200
      $region50: #{tpu_custom_call.1} parent=47 // pred_check_branch
        %716 = sbr.rel (%p714) target = $region52
      $region51: #{tpu_custom_call.1} parent=47 // pred_region
        _
      $region52: #{tpu_custom_call.1} parent=47 // pred_fallthru
        _
      // Predicated region
      $region53: #{tpu_custom_call.1} parent=47 // pred_check
        %p717 = pneg %p226
      $region54: #{tpu_custom_call.1} parent=47 // pred_check_branch
        %719 = sbr.rel (%p717) target = $region56
      $region55: #{tpu_custom_call.1} parent=47 // pred_region
        _
      $region56: #{tpu_custom_call.1} parent=47 // pred_fallthru
        _
    $region48: #{tpu_custom_call.1} parent=5 // pred_fallthru
      _
    %p720 = scmp.le.s32.totalorder 2, %s15
    // Predicated region
    $region57: #{tpu_custom_call.1} parent=5 // pred_check
      %p721 = pneg %p720
    $region58: #{tpu_custom_call.1} parent=5 // pred_check_branch
      %723 = sbr.rel (%p721) target = $region60
    $region59: #{tpu_custom_call.1} parent=5 // pred_region
      %s724 = ssub.s32 %s15, 2
      // Predicated region
      $region61: #{tpu_custom_call.1} parent=59 // pred_check
        %p725 = pneg %p206
      $region62: #{tpu_custom_call.1} parent=59 // pred_check_branch
        %727 = sbr.rel (%p725) target = $region64
      $region63: #{tpu_custom_call.1} parent=59 // pred_region
        %p728 = scmp.lt.s32.totalorder %s21, 1
        %s729 = scalar_select %p728, %s21, 1
        %s730 = smul.addr %s729, 2
        %s731 = smul.addr %s730, 8
        %s732 = scalar_lea.vmem %s7, %s731
      $region64: #{tpu_custom_call.1} parent=59 // pred_fallthru
        _
      // Predicated region
      $region65: #{tpu_custom_call.1} parent=59 // pred_check
        %p733 = pneg %p232
      $region66: #{tpu_custom_call.1} parent=59 // pred_check_branch
        %735 = sbr.rel (%p733) target = $region68
      $region67: #{tpu_custom_call.1} parent=59 // pred_region
        %p736 = scmp.lt.s32.totalorder %s21, 1
        %s737 = scalar_select %p736, %s21, 1
        %s738 = smul.addr %s737, 2
        %s739 = smul.addr %s738, 8
        %s740 = scalar_lea.vmem %s8, %s739
      $region68: #{tpu_custom_call.1} parent=59 // pred_fallthru
        _
    $region60: #{tpu_custom_call.1} parent=5 // pred_fallthru
      _
  $region6: #{tpu_custom_call.1} parent=0 // loop_footer
    %s19 = sadd.s32 1, %s15
  $region7: #{tpu_custom_call.1} parent=0 // loop_footer_branch
    %14 = sbr.rel target = $region3
  $region8: #{tpu_custom_call.1} parent=0 // loop_exit
    _

</llo_original>
